<compile_context>
chip_gen: v7x
topology: tpu7x:2x2x1
jax: 0.10.0
libtpu: 0.0.40
codegen_flags: <defaults>
</compile_context>

<pallas_src>
import functools

import jax
import jax.numpy as jnp
from jax.experimental import pallas as pl
from jax.experimental.pallas import tpu as pltpu


def _round_up(x: int, m: int) -> int:
    return ((x + m - 1) // m) * m


def _mlp_kernel(x_ref, w1_ref, b1_ref, w2_ref, b2_ref, o_ref):
    # Hidden layer: (tb, n_in_p) @ (n_in_p, n_hid_p), f32 accumulation.
    h = jnp.dot(x_ref[...], w1_ref[...], preferred_element_type=jnp.float32)
    # Bias + sigmoid in f32; exp runs on the EUP slot.
    h = jax.nn.sigmoid(h + b1_ref[...].astype(jnp.float32))
    # Output layer: (tb, n_hid_p) @ (n_hid_p, n_out_p), f32 accumulation.
    y = jnp.dot(h.astype(w2_ref.dtype), w2_ref[...],
                preferred_element_type=jnp.float32)
    y = y + b2_ref[...].astype(jnp.float32)
    # Lane-dense store: n_out_p is a multiple of 128 -> unmasked vst.
    o_ref[...] = y.astype(o_ref.dtype)


def prepare_params(w1_t, b1, w2_t, b2, dtype=None):
    """One-time padding (and optional cast, e.g. jnp.bfloat16) of the weights
    and biases to 128-multiples. Call once at init, NOT per forward."""
    n_input, n_hidden = w1_t.shape
    n_output = w2_t.shape[1]
    n_in_p = _round_up(n_input, 128)
    n_hid_p = _round_up(n_hidden, 128)
    n_out_p = _round_up(n_output, 128)
    if dtype is not None:
        w1_t, b1, w2_t, b2 = (a.astype(dtype) for a in (w1_t, b1, w2_t, b2))
    w1p = jnp.pad(w1_t, ((0, n_in_p - n_input), (0, n_hid_p - n_hidden)))
    b1p = jnp.pad(jnp.reshape(b1, (1, -1)), ((0, 0), (0, n_hid_p - n_hidden)))
    w2p = jnp.pad(w2_t, ((0, n_hid_p - n_hidden), (0, n_out_p - n_output)))
    b2p = jnp.pad(jnp.reshape(b2, (1, -1)), ((0, 0), (0, n_out_p - n_output)))
    return w1p, b1p, w2p, b2p


@functools.partial(jax.jit, static_argnames=("n_output",))
def classification_forward(x, w1p, b1p, w2p, b2p, *, n_output):
    """x: [B, n_input] (un-padded); w*/b*: pre-padded via prepare_params.
    Returns [B, n_output]."""
    batch, n_input = x.shape
    n_in_p, n_hid_p = w1p.shape
    n_out_p = w2p.shape[1]
    itemsize = x.dtype.itemsize

    # ---- Batch tile selection -------------------------------------------
    # Sublane multiple: 8 for f32, 16 for bf16 packing.
    sub = 16 if x.dtype == jnp.bfloat16 else 8
    if batch <= 1024:
        # Aim for >= 2 grid steps when batch > sub (v7x has 2 TensorCores).
        tb = min(512, max(sub, _round_up(-(-batch // 2), sub)))
    else:
        tb = 512  # amortizes ~0.35us per-step overhead; sweepable.

    def footprint(tb_):
        # Single-buffered resident weights + biases.
        w_bytes = (w1p.size * w1p.dtype.itemsize + b1p.size * b1p.dtype.itemsize
                   + w2p.size * w2p.dtype.itemsize + b2p.size * b2p.dtype.itemsize)
        # Double-buffered streamed x and y tiles.
        xy_bytes = 2 * tb_ * (n_in_p + n_out_p) * itemsize
        # f32 intermediates (h, y) the compiler may spill to internal scratch.
        tmp_bytes = 4 * tb_ * (n_hid_p + n_out_p)
        return w_bytes + xy_bytes + tmp_bytes

    # Shrink tb if needed so the footprint fits a conservative 48 MiB budget
    # (keeps us under v7x's 64 MiB/TC; v5e/v6e have 128 MiB).
    budget = 48 << 20
    while tb > sub and footprint(tb) > budget:
        tb = max(sub, _round_up(tb // 2, sub))

    batch_p = _round_up(batch, tb)
    grid = (batch_p // tb,)

    # Explicit VMEM limit: footprint + 25% headroom (avoids the 16/32 MiB
    # default scoped limits), clamped to physical.
    vmem_limit = min(max(int(footprint(tb) * 1.25) + (2 << 20), 16 << 20),
                     128 << 20)

    # ---- Per-call layout plumbing: only x is padded here ------------------
    xp = jnp.pad(x, ((0, batch_p - batch), (0, n_in_p - n_input)))

    # Advisory cost hint for the XLA scheduler.
    flops = 2 * batch_p * (n_in_p * n_hid_p + n_hid_p * n_out_p)
    bytes_accessed = (xp.size * itemsize
                      + w1p.size * w1p.dtype.itemsize
                      + b1p.size * b1p.dtype.itemsize
                      + w2p.size * w2p.dtype.itemsize
                      + b2p.size * b2p.dtype.itemsize
                      + batch_p * n_out_p * itemsize)
    cost = pl.CostEstimate(flops=flops,
                           transcendentals=batch_p * n_hid_p,
                           bytes_accessed=bytes_accessed)

    resident = pl.Buffered(1)  # constant index_map -> single buffer suffices.

    yp = pl.pallas_call(
        _mlp_kernel,
        out_shape=jax.ShapeDtypeStruct((batch_p, n_out_p), x.dtype),
        grid=grid,
        in_specs=[
            # x streams over the batch grid (default double-buffering).
            pl.BlockSpec((tb, n_in_p), lambda i: (i, 0)),
            # Weights / biases: resident in VMEM, single-buffered.
            pl.BlockSpec((n_in_p, n_hid_p), lambda i: (0, 0),
                         pipeline_mode=resident),
            pl.BlockSpec((1, n_hid_p), lambda i: (0, 0),
                         pipeline_mode=resident),
            pl.BlockSpec((n_hid_p, n_out_p), lambda i: (0, 0),
                         pipeline_mode=resident),
            pl.BlockSpec((1, n_out_p), lambda i: (0, 0),
                         pipeline_mode=resident),
        ],
        out_specs=pl.BlockSpec((tb, n_out_p), lambda i: (i, 0)),
        compiler_params=pltpu.CompilerParams(
            dimension_semantics=("parallel",),
            vmem_limit_bytes=vmem_limit,
        ),
        cost_estimate=cost,
    )(xp, w1p, b1p, w2p, b2p)

    # Slice padding back off.
    return yp[:batch, :n_output]


def init_params(key, n_input, n_hidden, n_output, dtype=jnp.float32):
    """Deterministic init mimicking torch.nn.Linear's default
    U(-1/sqrt(fan_in), 1/sqrt(fan_in)). Weights stored transposed as
    [in_features, out_features]."""
    k1, k2, k3, k4 = jax.random.split(key, 4)
    bound1 = 1.0 / jnp.sqrt(jnp.asarray(n_input, dtype))
    bound2 = 1.0 / jnp.sqrt(jnp.asarray(n_hidden, dtype))
    w1_t = jax.random.uniform(k1, (n_input, n_hidden), dtype, -bound1, bound1)
    b1 = jax.random.uniform(k2, (1, n_hidden), dtype, -bound1, bound1)
    w2_t = jax.random.uniform(k3, (n_hidden, n_output), dtype, -bound2, bound2)
    b2 = jax.random.uniform(k4, (1, n_output), dtype, -bound2, bound2)
    return w1_t, b1, w2_t, b2


if __name__ == "__main__":
    # Small shapes consistent with the module's forward.
    batch, n_input, n_hidden, n_output = 8, 32, 64, 16

    key = jax.random.PRNGKey(0)
    kx, kp = jax.random.split(key)
    x = jax.random.normal(kx, (batch, n_input), jnp.float32)
    w1_t, b1, w2_t, b2 = init_params(kp, n_input, n_hidden, n_output)

    # One-time weight padding (hoisted out of the per-call forward path).
    w1p, b1p, w2p, b2p = prepare_params(w1_t, b1, w2_t, b2)

    y = classification_forward(x, w1p, b1p, w2p, b2p, n_output=n_output)
    jax.block_until_ready(y)

    # Pure-JAX reference check of the same math.
    h_ref = jax.nn.sigmoid(x @ w1_t + b1)
    y_ref = h_ref @ w2_t + b2
    assert y.shape == (batch, n_output)
    assert jnp.allclose(y, y_ref, atol=1e-5, rtol=1e-5)

    print("KERNEL_OK")
</pallas_src>

<mosaic_0001>
module attributes {stable_mosaic.version = 11 : i64} {
  func.func @_mlp_kernel(%arg0: i32, %arg1: memref<8x128xf32, #tpu.memory_space<vmem>>, %arg2: memref<128x128xf32, #tpu.memory_space<vmem>>, %arg3: memref<1x128xf32, #tpu.memory_space<vmem>>, %arg4: memref<128x128xf32, #tpu.memory_space<vmem>>, %arg5: memref<1x128xf32, #tpu.memory_space<vmem>>, %arg6: memref<8x128xf32, #tpu.memory_space<vmem>>) attributes {dimension_semantics = [#tpu.dimension_semantics<parallel>], iteration_bounds = array<i64: 1>, scalar_prefetch = 0 : i64, scratch_operands = 0 : i64, tpu.core_type = #tpu.core_type<tc>, window_params = [{transform_indices = @transform_0, window_bounds = array<i64: 8, 128>}, {pipeline_mode = #tpu.pipeline_mode<synchronous>, transform_indices = @transform_1, window_bounds = array<i64: 128, 128>}, {pipeline_mode = #tpu.pipeline_mode<synchronous>, transform_indices = @transform_2, window_bounds = array<i64: 1, 128>}, {pipeline_mode = #tpu.pipeline_mode<synchronous>, transform_indices = @transform_3, window_bounds = array<i64: 128, 128>}, {pipeline_mode = #tpu.pipeline_mode<synchronous>, transform_indices = @transform_4, window_bounds = array<i64: 1, 128>}, {transform_indices = @transform_5, window_bounds = array<i64: 8, 128>}]} {
    %c0 = arith.constant 0 : index
    %c0_0 = arith.constant 0 : index
    %0 = vector.load %arg1[%c0, %c0_0] : memref<8x128xf32, #tpu.memory_space<vmem>>, vector<8x128xf32>
    %c0_1 = arith.constant 0 : index
    %c0_2 = arith.constant 0 : index
    %1 = vector.load %arg2[%c0_1, %c0_2] : memref<128x128xf32, #tpu.memory_space<vmem>>, vector<128x128xf32>
    %cst = arith.constant dense<0.000000e+00> : vector<8x128xf32>
    %2 = tpu.matmul %0, %1, %cst {dimension_numbers = #tpu.dot_dimension_numbers<[1], [0], [0], [1], [0, 0, 1, 1], [], []>} : vector<8x128xf32>, vector<128x128xf32>, vector<8x128xf32> -> vector<8x128xf32>
    %c0_3 = arith.constant 0 : index
    %c0_4 = arith.constant 0 : index
    %3 = vector.load %arg3[%c0_3, %c0_4] : memref<1x128xf32, #tpu.memory_space<vmem>>, vector<1x128xf32>
    %4 = vector.broadcast %3 : vector<1x128xf32> to vector<8x128xf32>
    %5 = arith.addf %2, %4 : vector<8x128xf32>
    %6 = arith.negf %5 : vector<8x128xf32>
    %7 = math.exp %6 : vector<8x128xf32>
    %cst_5 = arith.constant 1.000000e+00 : f32
    %8 = vector.broadcast %cst_5 : f32 to vector<8x128xf32>
    %9 = arith.addf %8, %7 : vector<8x128xf32>
    %10 = arith.divf %8, %9 : vector<8x128xf32>
    %c0_6 = arith.constant 0 : index
    %c0_7 = arith.constant 0 : index
    %11 = vector.load %arg4[%c0_6, %c0_7] : memref<128x128xf32, #tpu.memory_space<vmem>>, vector<128x128xf32>
    %cst_8 = arith.constant dense<0.000000e+00> : vector<8x128xf32>
    %12 = tpu.matmul %10, %11, %cst_8 {dimension_numbers = #tpu.dot_dimension_numbers<[1], [0], [0], [1], [0, 0, 1, 1], [], []>} : vector<8x128xf32>, vector<128x128xf32>, vector<8x128xf32> -> vector<8x128xf32>
    %c0_9 = arith.constant 0 : index
    %c0_10 = arith.constant 0 : index
    %13 = vector.load %arg5[%c0_9, %c0_10] : memref<1x128xf32, #tpu.memory_space<vmem>>, vector<1x128xf32>
    %14 = vector.broadcast %13 : vector<1x128xf32> to vector<8x128xf32>
    %15 = arith.addf %12, %14 : vector<8x128xf32>
    %c0_11 = arith.constant 0 : index
    %c0_12 = arith.constant 0 : index
    %16 = vector.load %arg6[%c0_11, %c0_12] : memref<8x128xf32, #tpu.memory_space<vmem>>, vector<8x128xf32>
    tpu.vector_store %arg6[%c0_11, %c0_12], %15 {strides = array<i32>} : memref<8x128xf32, #tpu.memory_space<vmem>>, vector<8x128xf32>,
    return
  }
  func.func @transform_0(%arg0: i32) -> (i32, i32) {
    %c0_i32 = arith.constant 0 : i32
    %c0_i32_0 = arith.constant 0 : i32
    return %arg0, %c0_i32 : i32, i32
  }
  func.func @transform_1(%arg0: i32) -> (i32, i32) {
    %c0_i32 = arith.constant 0 : i32
    %c0_i32_0 = arith.constant 0 : i32
    %c0_i32_1 = arith.constant 0 : i32
    return %c0_i32, %c0_i32_0 : i32, i32
  }
  func.func @transform_2(%arg0: i32) -> (i32, i32) {
    %c0_i32 = arith.constant 0 : i32
    %c0_i32_0 = arith.constant 0 : i32
    %c0_i32_1 = arith.constant 0 : i32
    return %c0_i32, %c0_i32_0 : i32, i32
  }
  func.func @transform_3(%arg0: i32) -> (i32, i32) {
    %c0_i32 = arith.constant 0 : i32
    %c0_i32_0 = arith.constant 0 : i32
    %c0_i32_1 = arith.constant 0 : i32
    return %c0_i32, %c0_i32_0 : i32, i32
  }
  func.func @transform_4(%arg0: i32) -> (i32, i32) {
    %c0_i32 = arith.constant 0 : i32
    %c0_i32_0 = arith.constant 0 : i32
    %c0_i32_1 = arith.constant 0 : i32
    return %c0_i32, %c0_i32_0 : i32, i32
  }
  func.func @transform_5(%arg0: i32) -> (i32, i32) {
    %c0_i32 = arith.constant 0 : i32
    %c0_i32_0 = arith.constant 0 : i32
    return %arg0, %c0_i32 : i32, i32
  }
}

</mosaic_0001>

<llo_original>
// kernel: classification_forward.1
$region0: #{classification_forward.1}
  #allocation0 [shape = 'u32[]', space=smem, size = 0x4, offset = 0x4, fixed_abs, tag = 'smem constant byte address 0x4 - core index']
  #allocation1 [shape = 'u32[144,128]{1,0:T(1,128)}', space=vmem, size = 0x12000, scoped, tag = 'internal scratch']
  %s0 = inlined_call_operand.vmem [shape: f32[8,128], index: 0, kind: input, shape index: {}]
  %s1 = inlined_call_operand.hbm [shape: f32[128,128], index: 1, kind: input, shape index: {}]
  %s2 = inlined_call_operand.vmem [shape: f32[1,128], index: 2, kind: input, shape index: {}]
  %s3 = inlined_call_operand.hbm [shape: f32[128,128], index: 3, kind: input, shape index: {}]
  %s4 = inlined_call_operand.vmem [shape: f32[1,128], index: 4, kind: input, shape index: {}]
  %s5 = inlined_call_operand.hbm [shape: f32[8,128], index: 5, kind: output, shape index: {}]
  %s6 = sld [smem:[#allocation0]]
  $region38: #{classification_forward.1} parent=0
    _
  %s8 = ssub.s32 1, %s6
  %s9 = scalar_select 0, %s8, %s6
  $region1: #{classification_forward.1} parent=0
    #allocation2 [shape = 'u8[65536]{0}', space=vmem, size = 0x10000, scoped, tag = 'input window, operand 1, single buffered']
    #allocation3 [shape = 's32[1]{0}', space=sflag, size = 0x4, scoped, tag = 'scoped memory for classification_forward.1']
    #allocation4 [shape = 's32[1]{0}', space=sflag, size = 0x4, scoped, tag = 'scoped memory for classification_forward.1']
    #allocation5 [shape = 'u8[65536]{0}', space=vmem, size = 0x10000, scoped, tag = 'input window, operand 3, single buffered']
    #allocation6 [shape = 's32[1]{0}', space=sflag, size = 0x4, scoped, tag = 'scoped memory for classification_forward.1']
    #allocation7 [shape = 'u8[4096]{0}', space=vmem, size = 0x1000, scoped, tag = 'output window, operand 0, single buffered']
    %10 = vsyncpa [#allocation3], 0
    %11 = vsyncpa [#allocation6], 0
    %12 = vsyncpa [#allocation4], 0
    // Predicated region
    $region2: #{classification_forward.1} parent=1 // pred_check
      _
    $region3: #{classification_forward.1} parent=1 // pred_check_branch
      %14 = sbr.rel (0) target = $region5
    $region4: #{classification_forward.1} parent=1 // pred_region
      _
    $region5: #{classification_forward.1} parent=1 // pred_fallthru
      _
    // Predicated region
    $region6: #{classification_forward.1} parent=1 // pred_check
      _
    $region7: #{classification_forward.1} parent=1 // pred_check_branch
      %16 = sbr.rel (0) target = $region9
    $region8: #{classification_forward.1} parent=1 // pred_region
      %s18 = ssub.s32 2048, 2048
      %19 = vsyncadd [#allocation3], %s18
      %s20 = sshll.u32 [#allocation2], 4
      %s21 = int_to_ptr.vmem [resolvable:$true] %s20
      %26 = dma.hbm_to_vmem [thread:$0]  %s1, 2048, %s21, [#allocation3], 128, 128, 8
    $region9: #{classification_forward.1} parent=1 // pred_fallthru
      _
    // Predicated region
    $region10: #{classification_forward.1} parent=1 // pred_check
      _
    $region11: #{classification_forward.1} parent=1 // pred_check_branch
      %28 = sbr.rel (0) target = $region13
    $region12: #{classification_forward.1} parent=1 // pred_region
      _
    $region13: #{classification_forward.1} parent=1 // pred_fallthru
      _
    // Predicated region
    $region14: #{classification_forward.1} parent=1 // pred_check
      _
    $region15: #{classification_forward.1} parent=1 // pred_check_branch
      %30 = sbr.rel (0) target = $region17
    $region16: #{classification_forward.1} parent=1 // pred_region
      %s32 = ssub.s32 2048, 2048
      %33 = vsyncadd [#allocation6], %s32
      %s34 = sshll.u32 [#allocation5], 4
      %s35 = int_to_ptr.vmem [resolvable:$true] %s34
      %40 = dma.hbm_to_vmem [thread:$0]  %s3, 2048, %s35, [#allocation6], 128, 128, 8
    $region17: #{classification_forward.1} parent=1 // pred_fallthru
      _
    // Predicated region
    $region18: #{classification_forward.1} parent=1 // pred_check
      _
    $region19: #{classification_forward.1} parent=1 // pred_check_branch
      %42 = sbr.rel (0) target = $region21
    $region20: #{classification_forward.1} parent=1 // pred_region
      _
    $region21: #{classification_forward.1} parent=1 // pred_fallthru
      _
    // Predicated region
    $region22: #{classification_forward.1} parent=1 // pred_check
      _
    $region23: #{classification_forward.1} parent=1 // pred_check_branch
      %44 = sbr.rel (0) target = $region25
    $region24: #{classification_forward.1} parent=1 // pred_region
      %45 = dma.done [#allocation3], 2048
    $region25: #{classification_forward.1} parent=1 // pred_fallthru
      _
    // Predicated region
    $region26: #{classification_forward.1} parent=1 // pred_check
      _
    $region27: #{classification_forward.1} parent=1 // pred_check_branch
      %47 = sbr.rel (0) target = $region29
    $region28: #{classification_forward.1} parent=1 // pred_region
      %48 = dma.done [#allocation6], 2048
    $region29: #{classification_forward.1} parent=1 // pred_fallthru
      _
    %v49 = vld [vmem:[%s0] sm:$0xff]
    %v50 = vld [vmem:[#allocation2] sm:$0xff]
    %v51 = vld [vmem:[#allocation2 + $0x8] sm:$0xff]
    %v52 = vld [vmem:[#allocation2 + $0x10] sm:$0xff]
    %v53 = vld [vmem:[#allocation2 + $0x18] sm:$0xff]
    %v54 = vld [vmem:[#allocation2 + $0x20] sm:$0xff]
    %v55 = vld [vmem:[#allocation2 + $0x28] sm:$0xff]
    %v56 = vld [vmem:[#allocation2 + $0x30] sm:$0xff]
    %v57 = vld [vmem:[#allocation2 + $0x38] sm:$0xff]
    %v58 = vld [vmem:[#allocation2 + $0x40] sm:$0xff]
    %v59 = vld [vmem:[#allocation2 + $0x48] sm:$0xff]
    %v60 = vld [vmem:[#allocation2 + $0x50] sm:$0xff]
    %v61 = vld [vmem:[#allocation2 + $0x58] sm:$0xff]
    %v62 = vld [vmem:[#allocation2 + $0x60] sm:$0xff]
    %v63 = vld [vmem:[#allocation2 + $0x68] sm:$0xff]
    %v64 = vld [vmem:[#allocation2 + $0x70] sm:$0xff]
    %v65 = vld [vmem:[#allocation2 + $0x78] sm:$0xff]
    %v66 = vld [vmem:[%s2] sm:$0x1]
    %v68 = vlaneseq
    %v69 = vshrl.u32 %v68, 7
    %v70 = vsub.s32 0, %v69
    %v71 = vrot.slane %v66, %v70
    %73 = vmatprep.subr.mxu0 0.0
    %74 = vmatpush1.msra.mxu0 %v50
    %75 = vmatprep.subr.mxu0 0.0
    %76 = vmatpush1.msra.mxu0 %v51
    %77 = vmatprep.subr.mxu0 0.0
    %78 = vmatpush1.msra.mxu0 %v52
    %79 = vmatprep.subr.mxu0 0.0
    %80 = vmatpush1.msra.mxu0 %v53
    %81 = vmatprep.subr.mxu0 0.0
    %82 = vmatpush1.msra.mxu0 %v54
    %83 = vmatprep.subr.mxu0 0.0
    %84 = vmatpush1.msra.mxu0 %v55
    %85 = vmatprep.subr.mxu0 0.0
    %86 = vmatpush1.msra.mxu0 %v56
    %87 = vmatprep.subr.mxu0 0.0
    %88 = vmatpush1.msra.mxu0 %v57
    %89 = vmatprep.subr.mxu0 0.0
    %90 = vmatpush1.msra.mxu0 %v58
    %91 = vmatprep.subr.mxu0 0.0
    %92 = vmatpush1.msra.mxu0 %v59
    %93 = vmatprep.subr.mxu0 0.0
    %94 = vmatpush1.msra.mxu0 %v60
    %95 = vmatprep.subr.mxu0 0.0
    %96 = vmatpush1.msra.mxu0 %v61
    %97 = vmatprep.subr.mxu0 0.0
    %98 = vmatpush1.msra.mxu0 %v62
    %99 = vmatprep.subr.mxu0 0.0
    %100 = vmatpush1.msra.mxu0 %v63
    %101 = vmatprep.subr.mxu0 0.0
    %102 = vmatpush1.msra.mxu0 %v64
    %103 = vmatprep.subr.mxu0 0.0
    %104 = vmatpush1.msra.mxu0 %v65
    %105 = vmatprep.subr.mxu0 0.0
    %106 = vmatpush1.msra.mxu0 0.0
    %107 = vmatprep.subr.mxu0 0.0
    %108 = vmatpush1.msra.mxu0 0.0
    %109 = vmatprep.subr.mxu0 0.0
    %110 = vmatpush1.msra.mxu0 0.0
    %111 = vmatprep.subr.mxu0 0.0
    %112 = vmatpush1.msra.mxu0 0.0
    %113 = vmatprep.subr.mxu0 0.0
    %114 = vmatpush1.msra.mxu0 0.0
    %115 = vmatprep.subr.mxu0 0.0
    %116 = vmatpush1.msra.mxu0 0.0
    %117 = vmatprep.subr.mxu0 0.0
    %118 = vmatpush1.msra.mxu0 0.0
    %119 = vmatprep.subr.mxu0 0.0
    %120 = vmatpush1.msra.mxu0 0.0
    %121 = vmatprep.subr.mxu0 0.0
    %122 = vmatpush1.msra.mxu0 0.0
    %123 = vmatprep.subr.mxu0 0.0
    %124 = vmatpush1.msra.mxu0 0.0
    %125 = vmatprep.subr.mxu0 0.0
    %126 = vmatpush1.msra.mxu0 0.0
    %127 = vmatprep.subr.mxu0 0.0
    %128 = vmatpush1.msra.mxu0 0.0
    %129 = vmatprep.subr.mxu0 0.0
    %130 = vmatpush1.msra.mxu0 0.0
    %131 = vmatprep.subr.mxu0 0.0
    %132 = vmatpush1.msra.mxu0 0.0
    %133 = vmatprep.subr.mxu0 0.0
    %134 = vmatpush1.msra.mxu0 0.0
    %135 = vmatprep.subr.mxu0 0.0
    %136 = vmatpush1.msra.mxu0 0.0
    %137 = vmatprep.mubr.f32.mxu0 0.0
    %138 = vmatmul.mubr.f32.gmra.mrb[0].mxu0 %v49
    %v139 = vpop.f32.mrb[0].mxu0
    %v140 = vadd.f32 %v71, %v139
    %v141 = vpop.f32.mrb[0].mxu0
    %142 = vdwg.mxu0
    %v143 = vxor.u32 %v140, 2147483648
    %v144 = vmul.f32 %v143, 1.442695
    %v145 = vpow.pop %v144
    %v146 = vadd.f32 %v145, 1.0
    %v147 = vrcp.pop %v146
    %v148 = vmul.f32 1.0, %v147
    %v149 = vld [vmem:[#allocation5] sm:$0xff]
    %v150 = vld [vmem:[#allocation5 + $0x8] sm:$0xff]
    %v151 = vld [vmem:[#allocation5 + $0x10] sm:$0xff]
    %v152 = vld [vmem:[#allocation5 + $0x18] sm:$0xff]
    %v153 = vld [vmem:[#allocation5 + $0x20] sm:$0xff]
    %v154 = vld [vmem:[#allocation5 + $0x28] sm:$0xff]
    %v155 = vld [vmem:[#allocation5 + $0x30] sm:$0xff]
    %v156 = vld [vmem:[#allocation5 + $0x38] sm:$0xff]
    %v157 = vld [vmem:[#allocation5 + $0x40] sm:$0xff]
    %v158 = vld [vmem:[#allocation5 + $0x48] sm:$0xff]
    %v159 = vld [vmem:[#allocation5 + $0x50] sm:$0xff]
    %v160 = vld [vmem:[#allocation5 + $0x58] sm:$0xff]
    %v161 = vld [vmem:[#allocation5 + $0x60] sm:$0xff]
    %v162 = vld [vmem:[#allocation5 + $0x68] sm:$0xff]
    %v163 = vld [vmem:[#allocation5 + $0x70] sm:$0xff]
    %v164 = vld [vmem:[#allocation5 + $0x78] sm:$0xff]
    %v165 = vld [vmem:[%s4] sm:$0x1]
    %v167 = vlaneseq
    %v168 = vshrl.u32 %v167, 7
    %v169 = vsub.s32 0, %v168
    %v170 = vrot.slane %v165, %v169
    %172 = vmatprep.subr.mxu0 0.0
    %173 = vmatpush1.msra.mxu0 %v149
    %174 = vmatprep.subr.mxu0 0.0
    %175 = vmatpush1.msra.mxu0 %v150
    %176 = vmatprep.subr.mxu0 0.0
    %177 = vmatpush1.msra.mxu0 %v151
    %178 = vmatprep.subr.mxu0 0.0
    %179 = vmatpush1.msra.mxu0 %v152
    %180 = vmatprep.subr.mxu0 0.0
    %181 = vmatpush1.msra.mxu0 %v153
    %182 = vmatprep.subr.mxu0 0.0
    %183 = vmatpush1.msra.mxu0 %v154
    %184 = vmatprep.subr.mxu0 0.0
    %185 = vmatpush1.msra.mxu0 %v155
    %186 = vmatprep.subr.mxu0 0.0
    %187 = vmatpush1.msra.mxu0 %v156
    %188 = vmatprep.subr.mxu0 0.0
    %189 = vmatpush1.msra.mxu0 %v157
    %190 = vmatprep.subr.mxu0 0.0
    %191 = vmatpush1.msra.mxu0 %v158
    %192 = vmatprep.subr.mxu0 0.0
    %193 = vmatpush1.msra.mxu0 %v159
    %194 = vmatprep.subr.mxu0 0.0
    %195 = vmatpush1.msra.mxu0 %v160
    %196 = vmatprep.subr.mxu0 0.0
    %197 = vmatpush1.msra.mxu0 %v161
    %198 = vmatprep.subr.mxu0 0.0
    %199 = vmatpush1.msra.mxu0 %v162
    %200 = vmatprep.subr.mxu0 0.0
    %201 = vmatpush1.msra.mxu0 %v163
    %202 = vmatprep.subr.mxu0 0.0
    %203 = vmatpush1.msra.mxu0 %v164
    %204 = vmatprep.subr.mxu0 0.0
    %205 = vmatpush1.msra.mxu0 0.0
    %206 = vmatprep.subr.mxu0 0.0
    %207 = vmatpush1.msra.mxu0 0.0
    %208 = vmatprep.subr.mxu0 0.0
    %209 = vmatpush1.msra.mxu0 0.0
    %210 = vmatprep.subr.mxu0 0.0
    %211 = vmatpush1.msra.mxu0 0.0
    %212 = vmatprep.subr.mxu0 0.0
    %213 = vmatpush1.msra.mxu0 0.0
    %214 = vmatprep.subr.mxu0 0.0
    %215 = vmatpush1.msra.mxu0 0.0
    %216 = vmatprep.subr.mxu0 0.0
    %217 = vmatpush1.msra.mxu0 0.0
    %218 = vmatprep.subr.mxu0 0.0
    %219 = vmatpush1.msra.mxu0 0.0
    %220 = vmatprep.subr.mxu0 0.0
    %221 = vmatpush1.msra.mxu0 0.0
    %222 = vmatprep.subr.mxu0 0.0
    %223 = vmatpush1.msra.mxu0 0.0
    %224 = vmatprep.subr.mxu0 0.0
    %225 = vmatpush1.msra.mxu0 0.0
    %226 = vmatprep.subr.mxu0 0.0
    %227 = vmatpush1.msra.mxu0 0.0
    %228 = vmatprep.subr.mxu0 0.0
    %229 = vmatpush1.msra.mxu0 0.0
    %230 = vmatprep.subr.mxu0 0.0
    %231 = vmatpush1.msra.mxu0 0.0
    %232 = vmatprep.subr.mxu0 0.0
    %233 = vmatpush1.msra.mxu0 0.0
    %234 = vmatprep.subr.mxu0 0.0
    %235 = vmatpush1.msra.mxu0 0.0
    %236 = vmatprep.mubr.f32.mxu0 0.0
    %237 = vmatmul.mubr.f32.gmra.mrb[0].mxu0 %v148
    %v238 = vpop.f32.mrb[0].mxu0
    %v239 = vadd.f32 %v170, %v238
    %v240 = vpop.f32.mrb[0].mxu0
    %241 = vdwg.mxu0
    %242 = vst [vmem:[#allocation7] sm:$0xff] %v239
    // Predicated region
    $region30: #{classification_forward.1} parent=1 // pred_check
      _
    $region31: #{classification_forward.1} parent=1 // pred_check_branch
      %244 = sbr.rel (0) target = $region33
    $region32: #{classification_forward.1} parent=1 // pred_region
      %s246 = ssub.s32 128, 128
      %247 = vsyncadd [#allocation4], %s246
      %s249 = sshll.u32 [#allocation7], 4
      %s250 = int_to_ptr.vmem [resolvable:$true] %s249
      %252 = dma.vmem_to_hbm [thread:$0]  %s250, 128, %s5, [#allocation4]
    $region33: #{classification_forward.1} parent=1 // pred_fallthru
      _
    // Predicated region
    $region34: #{classification_forward.1} parent=1 // pred_check
      _
    $region35: #{classification_forward.1} parent=1 // pred_check_branch
      %254 = sbr.rel (0) target = $region37
    $region36: #{classification_forward.1} parent=1 // pred_region
      %255 = dma.done [#allocation4], 128
    $region37: #{classification_forward.1} parent=1 // pred_fallthru
      _
    %256 = vsyncpa [#allocation3], 1
    %257 = vsyncpa [#allocation6], 1
    %258 = vsyncpa [#allocation4], 1

</llo_original>
